<compile_context>
chip_gen: v7x
topology: tpu7x:2x2x1
jax: 0.10.0
libtpu: 0.0.40
codegen_flags: <defaults>
</compile_context>

<pallas_src>
import jax
import jax.numpy as jnp
import numpy as np
from jax.experimental import pallas as pl
from jax.experimental.pallas import tpu as pltpu


def make_sinusoid_table(n_position: int, d_hid: int) -> jnp.ndarray:
    """Deterministic sinusoid positional-encoding table (matches the PyTorch code)."""
    pos = np.arange(n_position, dtype=np.float64)[:, None]            # (P, 1)
    hid = np.arange(d_hid, dtype=np.int64)[None, :]                   # (1, D)
    denom = np.power(10000.0, 2.0 * ((hid // 2) / float(d_hid)))      # (1, D)
    table = pos / denom                                               # (P, D)
    table[:, 0::2] = np.sin(table[:, 0::2])
    table[:, 1::2] = np.cos(table[:, 1::2])
    return jnp.asarray(table, dtype=jnp.float32)


def _pe_add_kernel(x_ref, pos_ref, o_ref):
    # Pure streaming VPU add; pos broadcasts over the leading (batch/sublane) dim
    # when its block has a single row.  Cast keeps output dtype == x dtype.
    o_ref[...] = (x_ref[...] + pos_ref[...]).astype(o_ref.dtype)


def _pick_tile(total: int, quantum: int, max_elems: int) -> int:
    """Largest multiple of `quantum` that divides `total`, capped near `max_elems`."""
    t = max(quantum, (min(total, max_elems) // quantum) * quantum)
    while total % t != 0:
        t -= quantum
    return t


def positional_encoding_forward(x: jnp.ndarray, pos_table: jnp.ndarray,
                                *, block_bytes: int = 2 * 1024 * 1024) -> jnp.ndarray:
    """x: (B, S, D); pos_table: (n_position, D) float32.  Returns x + pos_table[:S]."""
    B, S, D = x.shape
    n_position, d_hid = pos_table.shape
    assert d_hid == D, "hidden size mismatch between x and pos_table"
    assert S <= n_position, "sequence length exceeds n_position"

    itemsize = x.dtype.itemsize
    pos_table = pos_table.astype(jnp.float32)

    if D % 128 != 0 and (S * D) % 128 == 0:
        # ---- Lane-dense flat path (e.g. small D like the demo's 32) -------------
        # View x as (B, S*D): last dim of every block is a large multiple of 128,
        # so stores are unmasked full-lane writes; pos rides as a single (1, TC) row.
        SD = S * D
        x2 = x.reshape(B, SD)
        pos2 = pos_table[:S].reshape(1, SD)   # layout plumbing, one-off S*D*4 bytes

        tc = _pick_tile(SD, 128, max(128, block_bytes // (B * itemsize)))
        grid = (SD // tc,)

        out2 = pl.pallas_call(
            _pe_add_kernel,
            out_shape=jax.ShapeDtypeStruct((B, SD), x.dtype),
            grid_spec=pltpu.PrefetchScalarGridSpec(
                num_scalar_prefetch=0,
                grid=grid,
                in_specs=[
                    pl.BlockSpec((B, tc), lambda c: (0, c)),   # x: all batches, chunk c
                    pl.BlockSpec((1, tc), lambda c: (0, c)),   # pos: same chunk, 1 row
                ],
                out_specs=pl.BlockSpec((B, tc), lambda c: (0, c)),
            ),
            compiler_params=pltpu.CompilerParams(
                dimension_semantics=("parallel",),
            ),
            input_output_aliases={0: 0},   # donate x2: pure in-place elementwise add
        )(x2, pos2)
        return out2.reshape(B, S, D)

    # ---- 3-D path: tile the sequence axis (lane-dense whenever D % 128 == 0) ----
    if S % 8 == 0:
        ts = _pick_tile(S, 8, max(8, block_bytes // (D * itemsize)))
    else:
        ts = S  # full-S block is always legal (equals the full array dim)
    pos_s = pos_table[:S]            # (S, D) so a (ts, D) block is legal for any ts
    grid = (S // ts, B)              # batch innermost -> pos tile resident across B

    return pl.pallas_call(
        _pe_add_kernel,
        out_shape=jax.ShapeDtypeStruct((B, S, D), x.dtype),
        grid_spec=pltpu.PrefetchScalarGridSpec(
            num_scalar_prefetch=0,
            grid=grid,
            in_specs=[
                # batch dim squeezed -> kernel body sees plain (ts, D) refs
                pl.BlockSpec((pl.Squeezed(), ts, D), lambda s, b: (b, s, 0)),
                pl.BlockSpec((ts, D), lambda s, b: (s, 0)),   # ignores b: stays resident
            ],
            out_specs=pl.BlockSpec((pl.Squeezed(), ts, D), lambda s, b: (b, s, 0)),
        ),
        compiler_params=pltpu.CompilerParams(
            dimension_semantics=("parallel", "parallel"),
        ),
        input_output_aliases={0: 0},   # donate x
    )(x, pos_s)


if __name__ == "__main__":
    B, S, D = 2, 8, 32
    n_position = 200

    key = jax.random.PRNGKey(0)
    x = jax.random.normal(key, (B, S, D), dtype=jnp.float32)
    pos_table = make_sinusoid_table(n_position, D)

    # Reference computed BEFORE the kernel call (x is donated to the output).
    ref = x + pos_table[None, :S, :]
    ref = jax.block_until_ready(ref)

    out = positional_encoding_forward(x, pos_table)
    out = jax.block_until_ready(out)

    assert out.shape == (B, S, D)
    assert out.dtype == jnp.float32
    assert jnp.allclose(out, ref, atol=1e-6), "mismatch vs reference"

    # TODO(synk): vis_pos_vec (matplotlib plotting helper) has no kernel equivalent.
    print("KERNEL_OK")
</pallas_src>

<mosaic_0001>
module attributes {stable_mosaic.version = 11 : i64} {
  func.func @_pe_add_kernel(%arg0: i32, %arg1: memref<2x256xf32, #tpu.memory_space<vmem>>, %arg2: memref<1x256xf32, #tpu.memory_space<vmem>>, %arg3: memref<2x256xf32, #tpu.memory_space<vmem>>) attributes {dimension_semantics = [#tpu.dimension_semantics<parallel>], iteration_bounds = array<i64: 1>, scalar_prefetch = 0 : i64, scratch_operands = 0 : i64, tpu.core_type = #tpu.core_type<tc>, window_params = [{transform_indices = @transform_0, window_bounds = array<i64: 2, 256>}, {transform_indices = @transform_1, window_bounds = array<i64: 1, 256>}, {transform_indices = @transform_2, window_bounds = array<i64: 2, 256>}]} {
    %c0 = arith.constant 0 : index
    %c0_0 = arith.constant 0 : index
    %0 = vector.load %arg1[%c0, %c0_0] : memref<2x256xf32, #tpu.memory_space<vmem>>, vector<2x256xf32>
    %c0_1 = arith.constant 0 : index
    %c0_2 = arith.constant 0 : index
    %1 = vector.load %arg2[%c0_1, %c0_2] : memref<1x256xf32, #tpu.memory_space<vmem>>, vector<1x256xf32>
    %2 = vector.broadcast %1 : vector<1x256xf32> to vector<2x256xf32>
    %3 = arith.addf %0, %2 : vector<2x256xf32>
    %c0_3 = arith.constant 0 : index
    %c0_4 = arith.constant 0 : index
    %4 = vector.load %arg3[%c0_3, %c0_4] : memref<2x256xf32, #tpu.memory_space<vmem>>, vector<2x256xf32>
    tpu.vector_store %arg3[%c0_3, %c0_4], %3 {strides = array<i32>} : memref<2x256xf32, #tpu.memory_space<vmem>>, vector<2x256xf32>,
    return
  }
  func.func @transform_0(%arg0: i32) -> (i32, i32) {
    %c0_i32 = arith.constant 0 : i32
    %c0_i32_0 = arith.constant 0 : i32
    return %c0_i32, %arg0 : i32, i32
  }
  func.func @transform_1(%arg0: i32) -> (i32, i32) {
    %c0_i32 = arith.constant 0 : i32
    %c0_i32_0 = arith.constant 0 : i32
    return %c0_i32, %arg0 : i32, i32
  }
  func.func @transform_2(%arg0: i32) -> (i32, i32) {
    %c0_i32 = arith.constant 0 : i32
    %c0_i32_0 = arith.constant 0 : i32
    return %c0_i32, %arg0 : i32, i32
  }
}

</mosaic_0001>

<llo_original>
// kernel: tpu_custom_call.1
$region0: #{tpu_custom_call.1}
  #allocation0 [shape = 'u32[]', space=smem, size = 0x4, offset = 0x4, fixed_abs, tag = 'smem constant byte address 0x4 - core index']
  #allocation1 [shape = 'u32[144,128]{1,0:T(1,128)}', space=vmem, size = 0x12000, scoped, tag = 'internal scratch']
  %s0 = inlined_call_operand.hbm [shape: f32[2,256], index: 0, kind: input, shape index: {}, may-alias: {0,2}]
  %s1 = inlined_call_operand.vmem [shape: f32[1,256], index: 1, kind: input, shape index: {}]
  %s2 = inlined_call_operand.hbm [shape: f32[2,256], index: 2, kind: output, shape index: {}, may-alias: {0,2}]
  %s3 = sld [smem:[#allocation0]]
  $region22: #{tpu_custom_call.1} parent=0
    _
  %s5 = ssub.s32 1, %s3
  %s6 = scalar_select 0, %s5, %s3
  $region1: #{tpu_custom_call.1} parent=0
    #allocation2 [shape = 'u8[2048]{0}', space=vmem, size = 0x800, scoped, tag = 'input window, operand 0, single buffered']
    #allocation3 [shape = 's32[1]{0}', space=sflag, size = 0x4, scoped, tag = 'scoped memory for tpu_custom_call.1']
    #allocation4 [shape = 's32[1]{0}', space=sflag, size = 0x4, scoped, tag = 'scoped memory for tpu_custom_call.1']
    #allocation5 [shape = 'u8[2048]{0}', space=vmem, size = 0x800, scoped, tag = 'output window, operand 0, single buffered']
    %7 = vsyncpa [#allocation3], 0
    %8 = vsyncpa [#allocation4], 0
    // Predicated region
    $region2: #{tpu_custom_call.1} parent=1 // pred_check
      _
    $region3: #{tpu_custom_call.1} parent=1 // pred_check_branch
      %10 = sbr.rel (0) target = $region5
    $region4: #{tpu_custom_call.1} parent=1 // pred_region
      %s12 = ssub.s32 64, 64
      %13 = vsyncadd [#allocation3], %s12
      %s15 = sshll.u32 [#allocation2], 4
      %s16 = int_to_ptr.vmem [resolvable:$true] %s15
      %18 = dma.hbm_to_vmem [thread:$0]  %s0, 64, %s16, [#allocation3]
    $region5: #{tpu_custom_call.1} parent=1 // pred_fallthru
      _
    // Predicated region
    $region6: #{tpu_custom_call.1} parent=1 // pred_check
      _
    $region7: #{tpu_custom_call.1} parent=1 // pred_check_branch
      %20 = sbr.rel (0) target = $region9
    $region8: #{tpu_custom_call.1} parent=1 // pred_region
      _
    $region9: #{tpu_custom_call.1} parent=1 // pred_fallthru
      _
    // Predicated region
    $region10: #{tpu_custom_call.1} parent=1 // pred_check
      _
    $region11: #{tpu_custom_call.1} parent=1 // pred_check_branch
      %22 = sbr.rel (0) target = $region13
    $region12: #{tpu_custom_call.1} parent=1 // pred_region
      %23 = dma.done [#allocation3], 64
    $region13: #{tpu_custom_call.1} parent=1 // pred_fallthru
      _
    %v24 = vld [vmem:[#allocation2] sm:$0xf]
    %v25 = vld [vmem:[%s1] sm:$0x3]
    %v27 = vlaneseq
    %v28 = vshrl.u32 %v27, 7
    %v29 = vsub.s32 0, %v28
    %v30 = vrot.slane %v25, %v29
    %v31 = vlaneseq
    %v32 = vshrl.u32 %v31, 7
    %v33 = vsub.s32 1, %v32
    %v34 = vrot.slane %v25, %v33
    %v35 = vcombine.low %v30, %v34
    %v37 = vunpack.c.l.s4 1983009808
    %v38 = vunpack.c.0.s8 %v37
    %v39 = vlaneseq
    %v40 = vshrl.u32 %v39, 7
    %v41 = vsub.s32 %v38, %v40
    %v42 = vrot.slane %v35, %v41
    %v44 = vadd.f32 %v24, %v42
    %45 = vst [vmem:[#allocation5] sm:$0xf] %v44
    // Predicated region
    $region14: #{tpu_custom_call.1} parent=1 // pred_check
      _
    $region15: #{tpu_custom_call.1} parent=1 // pred_check_branch
      %47 = sbr.rel (0) target = $region17
    $region16: #{tpu_custom_call.1} parent=1 // pred_region
      %s49 = ssub.s32 64, 64
      %50 = vsyncadd [#allocation4], %s49
      %s52 = sshll.u32 [#allocation5], 4
      %s53 = int_to_ptr.vmem [resolvable:$true] %s52
      %55 = dma.vmem_to_hbm [thread:$0]  %s53, 64, %s2, [#allocation4]
    $region17: #{tpu_custom_call.1} parent=1 // pred_fallthru
      _
    // Predicated region
    $region18: #{tpu_custom_call.1} parent=1 // pred_check
      _
    $region19: #{tpu_custom_call.1} parent=1 // pred_check_branch
      %57 = sbr.rel (0) target = $region21
    $region20: #{tpu_custom_call.1} parent=1 // pred_region
      %58 = dma.done [#allocation4], 64
    $region21: #{tpu_custom_call.1} parent=1 // pred_fallthru
      _
    %59 = vsyncpa [#allocation3], 1
    %60 = vsyncpa [#allocation4], 1

</llo_original>
